<compile_context>
chip_gen: v7x
topology: tpu7x:2x2x1
jax: 0.10.0
libtpu: 0.0.40
codegen_flags: <defaults>
</compile_context>

<pallas_src>
import functools

import jax
import jax.numpy as jnp
from jax import lax
from jax.experimental import pallas as pl
from jax.experimental.pallas import tpu as pltpu

_BN_EPS = 1e-5
_VMEM_LIMIT = 32 * 1024 * 1024      # safe scoped-VMEM budget on v5e / v6e / v7x
_FUSED_MAX_NODES = 512              # "auto" uses the single fused kernel below this
_MAX_TILE = 512                     # cap on node-tile size (per-buffer VMEM safety)


# ----------------------------------------------------------------------------
# shared helpers
# ----------------------------------------------------------------------------
def _apply_bn(h, stats, gamma, beta, inv_n, relu):
    """BatchNorm1d (training-mode stats, biased variance) on feature-major h (C, n_tile)."""
    mean = stats[:, 0:1] * inv_n                                   # (C, 1)
    var = jnp.maximum(stats[:, 1:2] * inv_n - mean * mean, 0.0)    # (C, 1)
    y = (h - mean) * lax.rsqrt(var + _BN_EPS) * gamma + beta
    if relu:
        y = jnp.maximum(y, 0.0)
    return y


def _pick_tile(n, preferred=None, cap=_MAX_TILE):
    """Largest node-tile that is a multiple of 128 and divides n (else full extent)."""
    if preferred is not None and n % preferred == 0 and (preferred % 128 == 0 or preferred == n):
        return preferred
    t = min(cap, (n // 128) * 128)
    while t >= 128:
        if n % t == 0:
            return t
        t -= 128
    return n    # full-extent blocks are always layout-legal


# ----------------------------------------------------------------------------
# fused path: whole network in a single pallas_call (small graphs)
# ----------------------------------------------------------------------------
def _fused_gcn_kernel(*refs, num_layers):
    adj_ref, x_ref = refs[0], refs[1]
    out_ref = refs[-1]
    layer_refs = refs[2:-1]                       # (w, b, gamma, beta) per layer

    a = adj_ref[...].astype(jnp.float32)          # (N, N) raw adjacency
    n = a.shape[0]
    inv_n = 1.0 / n

    # deg^{-1/2} + remaining-self-loop indicator (diag extracted via a mask;
    # no identity matrix is ever added, no [N,N] transpose is performed).
    rows = lax.broadcasted_iota(jnp.int32, (n, n), 0)
    cols = lax.broadcasted_iota(jnp.int32, (n, n), 1)
    diag = jnp.sum(jnp.where(rows == cols, a, 0.0), axis=0, keepdims=True)   # (1, N)
    selfw = jnp.where(diag == 0.0, 1.0, 0.0)                                 # (1, N)
    deg = jnp.sum(a, axis=0, keepdims=True) + selfw
    dinv = jnp.where(deg > 0.0, lax.rsqrt(deg), 0.0)                         # (1, N)
    self_scale = selfw * dinv * dinv

    x = x_ref[...].astype(jnp.float32)            # (C0, N) feature-major
    for layer in range(num_layers):
        w_ref, b_ref, g_ref, bt_ref = layer_refs[4 * layer: 4 * layer + 4]
        xw = jnp.dot(w_ref[...], x, preferred_element_type=jnp.float32)       # (Cout, N)
        h = (dinv * jnp.dot(xw * dinv, a, preferred_element_type=jnp.float32)
             + self_scale * xw + b_ref[...])                                  # (Cout, N)
        mean = jnp.sum(h, axis=1, keepdims=True) * inv_n
        c = h - mean
        var = jnp.sum(c * c, axis=1, keepdims=True) * inv_n
        h = c * lax.rsqrt(var + _BN_EPS) * g_ref[...] + bt_ref[...]
        if layer < num_layers - 1:
            h = jnp.maximum(h, 0.0)
        x = h
    out_ref[...] = x


def _gcn_forward_fused(params, x_fm, adj):
    n = adj.shape[0]
    num_layers = len(params)
    c_last = params[-1][0].shape[0]

    in_specs = [pl.BlockSpec((n, n), lambda i: (0, 0)),
                pl.BlockSpec(x_fm.shape, lambda i: (0, 0))]
    args = [adj, x_fm]
    for (w, b, gamma, beta) in params:
        for p in (w, b, gamma, beta):
            in_specs.append(pl.BlockSpec(p.shape, lambda i: (0, 0)))
            args.append(p)

    kernel = functools.partial(_fused_gcn_kernel, num_layers=num_layers)
    return pl.pallas_call(
        kernel,
        out_shape=jax.ShapeDtypeStruct((c_last, n), jnp.float32),
        grid=(1,),
        in_specs=in_specs,
        out_specs=pl.BlockSpec((c_last, n), lambda i: (0, 0)),
        compiler_params=pltpu.CompilerParams(
            dimension_semantics=("arbitrary",),
            vmem_limit_bytes=_VMEM_LIMIT),
    )(*args)


# ----------------------------------------------------------------------------
# tiled path (large graphs)
# ----------------------------------------------------------------------------
def _dinv_kernel(adj_ref, dinv_ref, colsum_acc, diag_acc, *, block_rows):
    """Accumulate column sums + diagonal of adj; emit (2, N): row0=deg^-1/2, row1=selfw."""
    k = pl.program_id(0)

    @pl.when(k == 0)
    def _():
        colsum_acc[...] = jnp.zeros_like(colsum_acc)
        diag_acc[...] = jnp.zeros_like(diag_acc)

    a = adj_ref[...].astype(jnp.float32)                       # (block_rows, N)
    rows = k * block_rows + lax.broadcasted_iota(jnp.int32, a.shape, 0)
    cols = lax.broadcasted_iota(jnp.int32, a.shape, 1)
    colsum_acc[...] += jnp.sum(a, axis=0, keepdims=True)
    diag_acc[...] += jnp.sum(jnp.where(rows == cols, a, 0.0), axis=0, keepdims=True)

    @pl.when(k == pl.num_programs(0) - 1)
    def _():
        selfw = jnp.where(diag_acc[...] == 0.0, 1.0, 0.0)
        deg = colsum_acc[...] + selfw
        dinv = jnp.where(deg > 0.0, lax.rsqrt(deg), 0.0)
        dinv_ref[0:1, :] = dinv
        dinv_ref[1:2, :] = selfw


def _compute_dinv(adj, block_rows):
    n = adj.shape[0]
    kernel = functools.partial(_dinv_kernel, block_rows=block_rows)
    return pl.pallas_call(
        kernel,
        out_shape=jax.ShapeDtypeStruct((2, n), jnp.float32),
        grid=(n // block_rows,),
        in_specs=[pl.BlockSpec((block_rows, n), lambda k: (k, 0))],
        out_specs=pl.BlockSpec((2, n), lambda k: (0, 0)),
        scratch_shapes=[pltpu.VMEM((1, n), jnp.float32),
                        pltpu.VMEM((1, n), jnp.float32)],
        compiler_params=pltpu.CompilerParams(
            dimension_semantics=("arbitrary",),
            vmem_limit_bytes=_VMEM_LIMIT),
    )(adj)


def _xw_kernel(x_ref, stats_ref, gamma_ref, beta_ref, w_ref, dinv_ref, y_ref, *,
               apply_bn, apply_relu, inv_n):
    """Fused (previous-layer BN + ReLU) -> W @ x -> deg^-1/2 scaling, per node tile."""
    x = x_ref[...].astype(jnp.float32)                         # (Cin, tm)
    if apply_bn:
        x = _apply_bn(x, stats_ref[...], gamma_ref[...], beta_ref[...], inv_n, apply_relu)
    xw = jnp.dot(w_ref[...], x, preferred_element_type=jnp.float32)   # (Cout, tm)
    y_ref[...] = xw * dinv_ref[0:1, :]


def _xw_call(x_fm, stats, gamma, beta, w, dinv_sw, *, tm, apply_bn, apply_relu, inv_n):
    c_in, n = x_fm.shape
    c_out = w.shape[0]
    kernel = functools.partial(_xw_kernel, apply_bn=apply_bn,
                               apply_relu=apply_relu, inv_n=inv_n)
    return pl.pallas_call(
        kernel,
        out_shape=jax.ShapeDtypeStruct((c_out, n), jnp.float32),
        grid=(n // tm,),
        in_specs=[
            pl.BlockSpec((c_in, tm), lambda i: (0, i)),    # features (prev h or x)
            pl.BlockSpec((c_in, 2), lambda i: (0, 0)),     # prev-layer BN stats
            pl.BlockSpec((c_in, 1), lambda i: (0, 0)),     # prev-layer gamma
            pl.BlockSpec((c_in, 1), lambda i: (0, 0)),     # prev-layer beta
            pl.BlockSpec((c_out, c_in), lambda i: (0, 0)),  # W (feature-major)
            pl.BlockSpec((2, tm), lambda i: (0, i)),       # dinv / selfw
        ],
        out_specs=pl.BlockSpec((c_out, tm), lambda i: (0, i)),
        compiler_params=pltpu.CompilerParams(
            dimension_semantics=("parallel",),
            vmem_limit_bytes=_VMEM_LIMIT),
    )(x_fm, stats, gamma, beta, w, dinv_sw)


def _agg_kernel(adj_ref, y_src_ref, y_dst_ref, dinv_ref, b_ref, h_ref, acc_ref):
    """h[:, i_blk] = dinv_i * sum_k (y[:, k_blk] @ A[k_blk, i_blk]) + selfw_i*dinv_i*y[:, i_blk] + b."""
    k = pl.program_id(1)

    @pl.when(k == 0)
    def _():
        acc_ref[...] = jnp.zeros_like(acc_ref)

    acc_ref[...] += jnp.dot(y_src_ref[...],
                            adj_ref[...].astype(jnp.float32),
                            preferred_element_type=jnp.float32)

    @pl.when(k == pl.num_programs(1) - 1)
    def _():
        dinv = dinv_ref[0:1, :]
        self_scale = dinv_ref[1:2, :] * dinv          # selfw * deg^-1/2 (applied to y = dinv*xw)
        h_ref[...] = dinv * acc_ref[...] + self_scale * y_dst_ref[...] + b_ref[...]


def _agg_call(adj, y_fm, dinv_sw, b, *, tm, tk):
    n = adj.shape[0]
    c_out = y_fm.shape[0]
    return pl.pallas_call(
        _agg_kernel,
        out_shape=jax.ShapeDtypeStruct((c_out, n), jnp.float32),
        grid=(n // tm, n // tk),
        in_specs=[
            pl.BlockSpec((tk, tm), lambda i, k: (k, i)),      # raw adjacency block
            pl.BlockSpec((c_out, tk), lambda i, k: (0, k)),   # y at source nodes
            pl.BlockSpec((c_out, tm), lambda i, k: (0, i)),   # y at destination nodes
            pl.BlockSpec((2, tm), lambda i, k: (0, i)),       # dinv / selfw
            pl.BlockSpec((c_out, 1), lambda i, k: (0, 0)),    # conv bias
        ],
        out_specs=pl.BlockSpec((c_out, tm), lambda i, k: (0, i)),
        scratch_shapes=[pltpu.VMEM((c_out, tm), jnp.float32)],
        compiler_params=pltpu.CompilerParams(
            dimension_semantics=("parallel", "arbitrary"),
            vmem_limit_bytes=_VMEM_LIMIT),
    )(adj, y_fm, y_fm, dinv_sw, b)


def _stats_kernel(h_ref, stats_ref, s_acc, ss_acc):
    """Per-channel sum / sum-of-squares over the node axis (full-array BN statistics)."""
    i = pl.program_id(0)

    @pl.when(i == 0)
    def _():
        s_acc[...] = jnp.zeros_like(s_acc)
        ss_acc[...] = jnp.zeros_like(ss_acc)

    h = h_ref[...]
    s_acc[...] += jnp.sum(h, axis=1, keepdims=True)
    ss_acc[...] += jnp.sum(h * h, axis=1, keepdims=True)

    @pl.when(i == pl.num_programs(0) - 1)
    def _():
        stats_ref[:, 0:1] = s_acc[...]
        stats_ref[:, 1:2] = ss_acc[...]


def _stats_call(h_fm, *, tm):
    c, n = h_fm.shape
    return pl.pallas_call(
        _stats_kernel,
        out_shape=jax.ShapeDtypeStruct((c, 2), jnp.float32),
        grid=(n // tm,),
        in_specs=[pl.BlockSpec((c, tm), lambda i: (0, i))],
        out_specs=pl.BlockSpec((c, 2), lambda i: (0, 0)),
        scratch_shapes=[pltpu.VMEM((c, 1), jnp.float32),
                        pltpu.VMEM((c, 1), jnp.float32)],
        compiler_params=pltpu.CompilerParams(
            dimension_semantics=("arbitrary",),
            vmem_limit_bytes=_VMEM_LIMIT),
    )(h_fm)


def _bn_kernel(h_ref, stats_ref, gamma_ref, beta_ref, out_ref, *, apply_relu, inv_n):
    out_ref[...] = _apply_bn(h_ref[...], stats_ref[...], gamma_ref[...], beta_ref[...],
                             inv_n, apply_relu)


def _bn_call(h_fm, stats, gamma, beta, *, tm, apply_relu, inv_n):
    c, n = h_fm.shape
    kernel = functools.partial(_bn_kernel, apply_relu=apply_relu, inv_n=inv_n)
    return pl.pallas_call(
        kernel,
        out_shape=jax.ShapeDtypeStruct((c, n), jnp.float32),
        grid=(n // tm,),
        in_specs=[
            pl.BlockSpec((c, tm), lambda i: (0, i)),
            pl.BlockSpec((c, 2), lambda i: (0, 0)),
            pl.BlockSpec((c, 1), lambda i: (0, 0)),
            pl.BlockSpec((c, 1), lambda i: (0, 0)),
        ],
        out_specs=pl.BlockSpec((c, tm), lambda i: (0, i)),
        compiler_params=pltpu.CompilerParams(
            dimension_semantics=("parallel",),
            vmem_limit_bytes=_VMEM_LIMIT),
    )(h_fm, stats, gamma, beta)


def _gcn_forward_tiled(params, x_fm, adj, block=None):
    n = adj.shape[0]
    tm = _pick_tile(n, preferred=block)
    tk = _pick_tile(n, preferred=block)
    inv_n = 1.0 / n

    dinv_sw = _compute_dinv(adj, tk)            # (2, N): deg^-1/2, self-loop indicator

    h = x_fm
    stats = None
    for layer, (w, b, gamma, beta) in enumerate(params):
        c_in = w.shape[1]
        if layer == 0:
            dummy_stats = jnp.zeros((c_in, 2), jnp.float32)
            dummy_g = jnp.ones((c_in, 1), jnp.float32)
            dummy_b = jnp.zeros((c_in, 1), jnp.float32)
            y = _xw_call(h, dummy_stats, dummy_g, dummy_b, w, dinv_sw,
                         tm=tm, apply_bn=False, apply_relu=False, inv_n=inv_n)
        else:
            prev_gamma, prev_beta = params[layer - 1][2], params[layer - 1][3]
            y = _xw_call(h, stats, prev_gamma, prev_beta, w, dinv_sw,
                         tm=tm, apply_bn=True, apply_relu=True, inv_n=inv_n)
        h = _agg_call(adj, y, dinv_sw, b, tm=tm, tk=tk)
        stats = _stats_call(h, tm=tm)

    gamma_last, beta_last = params[-1][2], params[-1][3]
    return _bn_call(h, stats, gamma_last, beta_last,
                    tm=tm, apply_relu=False, inv_n=inv_n)


# ----------------------------------------------------------------------------
# public API
# ----------------------------------------------------------------------------
def init_gcn_params(channels_list, key):
    """Synthetic init: glorot-uniform conv weights (stored feature-major (Cout, Cin)),
    zero conv bias, BN gamma=1 / beta=0 (fresh-module defaults)."""
    if len(channels_list) < 2:
        raise ValueError("channels_list must have at least 2 elements")
    params = []
    for i in range(len(channels_list) - 1):
        c_in, c_out = channels_list[i], channels_list[i + 1]
        key, wk = jax.random.split(key)
        limit = (6.0 / (c_in + c_out)) ** 0.5
        w = jax.random.uniform(wk, (c_out, c_in), jnp.float32, -limit, limit)
        b = jnp.zeros((c_out, 1), jnp.float32)
        gamma = jnp.ones((c_out, 1), jnp.float32)
        beta = jnp.zeros((c_out, 1), jnp.float32)
        params.append((w, b, gamma, beta))
    return params


def gcn_forward(params, x, adj, mode="auto", block=None):
    """x: (N, C_in) node features; adj: (N, N) dense adjacency (any float dtype,
    bf16 recommended for 0/1 edge weights). Returns (N, C_out) float32."""
    n = x.shape[0]
    x_fm = jnp.transpose(x).astype(jnp.float32)        # feature-major (C, N)
    if mode == "auto":
        mode = "fused" if n <= _FUSED_MAX_NODES else "tiled"
    if mode == "fused":
        out_fm = _gcn_forward_fused(params, x_fm, adj)
    elif mode == "tiled":
        out_fm = _gcn_forward_tiled(params, x_fm, adj, block=block)
    else:
        raise ValueError(f"unknown mode: {mode}")
    return jnp.transpose(out_fm)                       # back to node-major (N, C_out)


def gcn_reference(params, x, adj):
    """Pure-jnp reference with identical semantics (node-major layout)."""
    a = adj.astype(jnp.float32)
    diag = jnp.diagonal(a)
    selfw = jnp.where(diag == 0.0, 1.0, 0.0)
    deg = jnp.sum(a, axis=0) + selfw
    dinv = jnp.where(deg > 0.0, 1.0 / jnp.sqrt(deg), 0.0)
    h = x.astype(jnp.float32)
    num_layers = len(params)
    for i, (w, b, gamma, beta) in enumerate(params):
        xw = h @ w.T
        y = dinv[:, None] * xw
        agg = a.T @ y
        hh = dinv[:, None] * agg + (selfw * dinv * dinv)[:, None] * xw + b.reshape(1, -1)
        mean = jnp.mean(hh, axis=0, keepdims=True)
        var = jnp.mean((hh - mean) ** 2, axis=0, keepdims=True)
        hh = (hh - mean) / jnp.sqrt(var + _BN_EPS) * gamma.reshape(1, -1) + beta.reshape(1, -1)
        if i < num_layers - 1:
            hh = jnp.maximum(hh, 0.0)
        h = hh
    return h


if __name__ == "__main__":
    key = jax.random.PRNGKey(0)
    k_x1, k_a1, k_p1, k_x2, k_a2, k_p2 = jax.random.split(key, 6)

    # ---- small graph: fused whole-network single pallas_call ----
    n1 = 16
    channels1 = [8, 32, 16]
    x1 = jax.random.normal(k_x1, (n1, channels1[0]), jnp.float32)
    a1 = (jax.random.uniform(k_a1, (n1, n1)) < 0.3).astype(jnp.float32)
    adj1 = (jnp.maximum(a1, a1.T) * (1.0 - jnp.eye(n1, dtype=jnp.float32)))
    adj1 = adj1.astype(jnp.bfloat16)      # 0/1 weights are exact in bf16 (halves HBM traffic)
    params1 = init_gcn_params(channels1, k_p1)

    fwd_fused = jax.jit(functools.partial(gcn_forward, mode="fused"))
    out1 = jax.block_until_ready(fwd_fused(params1, x1, adj1))
    assert out1.shape == (n1, channels1[-1]) and out1.dtype == jnp.float32
    ref1 = gcn_reference(params1, x1, adj1)
    assert jnp.allclose(out1, ref1, rtol=5e-3, atol=5e-3), float(jnp.max(jnp.abs(out1 - ref1)))

    # ---- larger graph: tiled / pipelined multi-kernel path (2x2 adjacency grid) ----
    n2 = 512
    channels2 = [16, 64, 32]
    x2 = jax.random.normal(k_x2, (n2, channels2[0]), jnp.float32)
    a2 = (jax.random.uniform(k_a2, (n2, n2)) < 0.02).astype(jnp.float32)
    adj2 = (jnp.maximum(a2, a2.T) * (1.0 - jnp.eye(n2, dtype=jnp.float32)))
    adj2 = adj2.astype(jnp.bfloat16)
    params2 = init_gcn_params(channels2, k_p2)

    fwd_tiled = jax.jit(functools.partial(gcn_forward, mode="tiled", block=256))
    out2 = jax.block_until_ready(fwd_tiled(params2, x2, adj2))
    assert out2.shape == (n2, channels2[-1]) and out2.dtype == jnp.float32
    ref2 = gcn_reference(params2, x2, adj2)
    assert jnp.allclose(out2, ref2, rtol=5e-3, atol=5e-3), float(jnp.max(jnp.abs(out2 - ref2)))

    print("KERNEL_OK")
</pallas_src>

<mosaic_0001>
module attributes {stable_mosaic.version = 11 : i64} {
  func.func @_fused_gcn_kernel(%arg0: i32, %arg1: memref<16x16xbf16, #tpu.memory_space<vmem>>, %arg2: memref<8x16xf32, #tpu.memory_space<vmem>>, %arg3: memref<32x8xf32, #tpu.memory_space<vmem>>, %arg4: memref<32x1xf32, #tpu.memory_space<vmem>>, %arg5: memref<32x1xf32, #tpu.memory_space<vmem>>, %arg6: memref<32x1xf32, #tpu.memory_space<vmem>>, %arg7: memref<16x32xf32, #tpu.memory_space<vmem>>, %arg8: memref<16x1xf32, #tpu.memory_space<vmem>>, %arg9: memref<16x1xf32, #tpu.memory_space<vmem>>, %arg10: memref<16x1xf32, #tpu.memory_space<vmem>>, %arg11: memref<16x16xf32, #tpu.memory_space<vmem>>) attributes {dimension_semantics = [#tpu.dimension_semantics<arbitrary>], iteration_bounds = array<i64: 1>, scalar_prefetch = 0 : i64, scratch_operands = 0 : i64, tpu.core_type = #tpu.core_type<tc>, window_params = [{pipeline_mode = #tpu.pipeline_mode<synchronous>, transform_indices = @transform_0, window_bounds = array<i64: 16, 16>}, {pipeline_mode = #tpu.pipeline_mode<synchronous>, transform_indices = @transform_1, window_bounds = array<i64: 8, 16>}, {pipeline_mode = #tpu.pipeline_mode<synchronous>, transform_indices = @transform_2, window_bounds = array<i64: 32, 8>}, {pipeline_mode = #tpu.pipeline_mode<synchronous>, transform_indices = @transform_3, window_bounds = array<i64: 32, 1>}, {pipeline_mode = #tpu.pipeline_mode<synchronous>, transform_indices = @transform_4, window_bounds = array<i64: 32, 1>}, {pipeline_mode = #tpu.pipeline_mode<synchronous>, transform_indices = @transform_5, window_bounds = array<i64: 32, 1>}, {pipeline_mode = #tpu.pipeline_mode<synchronous>, transform_indices = @transform_6, window_bounds = array<i64: 16, 32>}, {pipeline_mode = #tpu.pipeline_mode<synchronous>, transform_indices = @transform_7, window_bounds = array<i64: 16, 1>}, {pipeline_mode = #tpu.pipeline_mode<synchronous>, transform_indices = @transform_8, window_bounds = array<i64: 16, 1>}, {pipeline_mode = #tpu.pipeline_mode<synchronous>, transform_indices = @transform_9, window_bounds = array<i64: 16, 1>}, {pipeline_mode = #tpu.pipeline_mode<synchronous>, transform_indices = @transform_10, window_bounds = array<i64: 16, 16>}]} {
    %c0 = arith.constant 0 : index
    %c0_0 = arith.constant 0 : index
    %0 = vector.load %arg1[%c0, %c0_0] : memref<16x16xbf16, #tpu.memory_space<vmem>>, vector<16x16xbf16>
    %1 = arith.extf %0 : vector<16x16xbf16> to vector<16x16xf32>
    %2 = tpu.iota {dimensions = array<i32: 0>} : vector<16x16xi32>
    %3 = tpu.iota {dimensions = array<i32: 1>} : vector<16x16xi32>
    %4 = arith.cmpi eq, %2, %3 : vector<16x16xi32>
    %cst = arith.constant 0.000000e+00 : f32
    %5 = vector.broadcast %cst : f32 to vector<16x16xf32>
    %6 = arith.select %4, %1, %5 : vector<16x16xi1>, vector<16x16xf32>
    %cst_1 = arith.constant dense<0.000000e+00> : vector<16xf32>
    %7 = vector.multi_reduction <add>, %6, %cst_1 [0] : vector<16x16xf32> to vector<16xf32>
    %8 = vector.shape_cast %7 : vector<16xf32> to vector<1x16xf32>
    %cst_2 = arith.constant 0.000000e+00 : f32
    %9 = vector.broadcast %cst_2 : f32 to vector<1x16xf32>
    %10 = arith.cmpf oeq, %8, %9 : vector<1x16xf32>
    %cst_3 = arith.constant 1.000000e+00 : f32
    %cst_4 = arith.constant 0.000000e+00 : f32
    %11 = vector.broadcast %cst_3 : f32 to vector<1x16xf32>
    %12 = vector.broadcast %cst_4 : f32 to vector<1x16xf32>
    %13 = arith.select %10, %11, %12 : vector<1x16xi1>, vector<1x16xf32>
    %cst_5 = arith.constant dense<0.000000e+00> : vector<16xf32>
    %14 = vector.multi_reduction <add>, %1, %cst_5 [0] : vector<16x16xf32> to vector<16xf32>
    %15 = vector.shape_cast %14 : vector<16xf32> to vector<1x16xf32>
    %16 = arith.addf %15, %13 : vector<1x16xf32>
    %cst_6 = arith.constant 0.000000e+00 : f32
    %17 = vector.broadcast %cst_6 : f32 to vector<1x16xf32>
    %18 = arith.cmpf ogt, %16, %17 : vector<1x16xf32>
    %19 = math.rsqrt %16 : vector<1x16xf32>
    %cst_7 = arith.constant 0.000000e+00 : f32
    %20 = vector.broadcast %cst_7 : f32 to vector<1x16xf32>
    %21 = arith.select %18, %19, %20 : vector<1x16xi1>, vector<1x16xf32>
    %22 = arith.mulf %13, %21 : vector<1x16xf32>
    %23 = arith.mulf %22, %21 : vector<1x16xf32>
    %c0_8 = arith.constant 0 : index
    %c0_9 = arith.constant 0 : index
    %24 = vector.load %arg2[%c0_8, %c0_9] : memref<8x16xf32, #tpu.memory_space<vmem>>, vector<8x16xf32>
    %c0_10 = arith.constant 0 : index
    %c0_11 = arith.constant 0 : index
    %25 = vector.load %arg3[%c0_10, %c0_11] : memref<32x8xf32, #tpu.memory_space<vmem>>, vector<32x8xf32>
    %cst_12 = arith.constant dense<0.000000e+00> : vector<32x16xf32>
    %26 = tpu.matmul %25, %24, %cst_12 {dimension_numbers = #tpu.dot_dimension_numbers<[1], [0], [0], [1], [0, 0, 1, 1], [], []>} : vector<32x8xf32>, vector<8x16xf32>, vector<32x16xf32> -> vector<32x16xf32>
    %27 = vector.broadcast %21 : vector<1x16xf32> to vector<32x16xf32>
    %28 = arith.mulf %26, %27 : vector<32x16xf32>
    %cst_13 = arith.constant dense<0.000000e+00> : vector<32x16xf32>
    %29 = tpu.matmul %28, %1, %cst_13 {dimension_numbers = #tpu.dot_dimension_numbers<[1], [0], [0], [1], [0, 0, 1, 1], [], []>} : vector<32x16xf32>, vector<16x16xf32>, vector<32x16xf32> -> vector<32x16xf32>
    %30 = vector.broadcast %21 : vector<1x16xf32> to vector<32x16xf32>
    %31 = arith.mulf %30, %29 : vector<32x16xf32>
    %32 = vector.broadcast %23 : vector<1x16xf32> to vector<32x16xf32>
    %33 = arith.mulf %32, %26 : vector<32x16xf32>
    %34 = arith.addf %31, %33 : vector<32x16xf32>
    %c0_14 = arith.constant 0 : index
    %c0_15 = arith.constant 0 : index
    %35 = vector.load %arg4[%c0_14, %c0_15] : memref<32x1xf32, #tpu.memory_space<vmem>>, vector<32x1xf32>
    %36 = vector.broadcast %35 : vector<32x1xf32> to vector<32x16xf32>
    %37 = arith.addf %34, %36 : vector<32x16xf32>
    %cst_16 = arith.constant dense<0.000000e+00> : vector<32xf32>
    %38 = vector.multi_reduction <add>, %37, %cst_16 [1] : vector<32x16xf32> to vector<32xf32>
    %39 = vector.shape_cast %38 : vector<32xf32> to vector<32x1xf32>
    %cst_17 = arith.constant 6.250000e-02 : f32
    %40 = vector.broadcast %cst_17 : f32 to vector<32x1xf32>
    %41 = arith.mulf %39, %40 : vector<32x1xf32>
    %42 = vector.broadcast %41 : vector<32x1xf32> to vector<32x16xf32>
    %43 = arith.subf %37, %42 : vector<32x16xf32>
    %44 = arith.mulf %43, %43 : vector<32x16xf32>
    %cst_18 = arith.constant dense<0.000000e+00> : vector<32xf32>
    %45 = vector.multi_reduction <add>, %44, %cst_18 [1] : vector<32x16xf32> to vector<32xf32>
    %46 = vector.shape_cast %45 : vector<32xf32> to vector<32x1xf32>
    %cst_19 = arith.constant 6.250000e-02 : f32
    %47 = vector.broadcast %cst_19 : f32 to vector<32x1xf32>
    %48 = arith.mulf %46, %47 : vector<32x1xf32>
    %cst_20 = arith.constant 9.99999974E-6 : f32
    %49 = vector.broadcast %cst_20 : f32 to vector<32x1xf32>
    %50 = arith.addf %48, %49 : vector<32x1xf32>
    %51 = math.rsqrt %50 : vector<32x1xf32>
    %52 = vector.broadcast %51 : vector<32x1xf32> to vector<32x16xf32>
    %53 = arith.mulf %43, %52 : vector<32x16xf32>
    %c0_21 = arith.constant 0 : index
    %c0_22 = arith.constant 0 : index
    %54 = vector.load %arg5[%c0_21, %c0_22] : memref<32x1xf32, #tpu.memory_space<vmem>>, vector<32x1xf32>
    %55 = vector.broadcast %54 : vector<32x1xf32> to vector<32x16xf32>
    %56 = arith.mulf %53, %55 : vector<32x16xf32>
    %c0_23 = arith.constant 0 : index
    %c0_24 = arith.constant 0 : index
    %57 = vector.load %arg6[%c0_23, %c0_24] : memref<32x1xf32, #tpu.memory_space<vmem>>, vector<32x1xf32>
    %58 = vector.broadcast %57 : vector<32x1xf32> to vector<32x16xf32>
    %59 = arith.addf %56, %58 : vector<32x16xf32>
    %cst_25 = arith.constant 0.000000e+00 : f32
    %60 = vector.broadcast %cst_25 : f32 to vector<32x16xf32>
    %61 = arith.maximumf %59, %60 : vector<32x16xf32>
    %c0_26 = arith.constant 0 : index
    %c0_27 = arith.constant 0 : index
    %62 = vector.load %arg7[%c0_26, %c0_27] : memref<16x32xf32, #tpu.memory_space<vmem>>, vector<16x32xf32>
    %cst_28 = arith.constant dense<0.000000e+00> : vector<16x16xf32>
    %63 = tpu.matmul %62, %61, %cst_28 {dimension_numbers = #tpu.dot_dimension_numbers<[1], [0], [0], [1], [0, 0, 1, 1], [], []>} : vector<16x32xf32>, vector<32x16xf32>, vector<16x16xf32> -> vector<16x16xf32>
    %64 = vector.broadcast %21 : vector<1x16xf32> to vector<16x16xf32>
    %65 = arith.mulf %63, %64 : vector<16x16xf32>
    %cst_29 = arith.constant dense<0.000000e+00> : vector<16x16xf32>
    %66 = tpu.matmul %65, %1, %cst_29 {dimension_numbers = #tpu.dot_dimension_numbers<[1], [0], [0], [1], [0, 0, 1, 1], [], []>} : vector<16x16xf32>, vector<16x16xf32>, vector<16x16xf32> -> vector<16x16xf32>
    %67 = vector.broadcast %21 : vector<1x16xf32> to vector<16x16xf32>
    %68 = arith.mulf %67, %66 : vector<16x16xf32>
    %69 = vector.broadcast %23 : vector<1x16xf32> to vector<16x16xf32>
    %70 = arith.mulf %69, %63 : vector<16x16xf32>
    %71 = arith.addf %68, %70 : vector<16x16xf32>
    %c0_30 = arith.constant 0 : index
    %c0_31 = arith.constant 0 : index
    %72 = vector.load %arg8[%c0_30, %c0_31] : memref<16x1xf32, #tpu.memory_space<vmem>>, vector<16x1xf32>
    %73 = vector.broadcast %72 : vector<16x1xf32> to vector<16x16xf32>
    %74 = arith.addf %71, %73 : vector<16x16xf32>
    %cst_32 = arith.constant dense<0.000000e+00> : vector<16xf32>
    %75 = vector.multi_reduction <add>, %74, %cst_32 [1] : vector<16x16xf32> to vector<16xf32>
    %76 = vector.shape_cast %75 : vector<16xf32> to vector<16x1xf32>
    %cst_33 = arith.constant 6.250000e-02 : f32
    %77 = vector.broadcast %cst_33 : f32 to vector<16x1xf32>
    %78 = arith.mulf %76, %77 : vector<16x1xf32>
    %79 = vector.broadcast %78 : vector<16x1xf32> to vector<16x16xf32>
    %80 = arith.subf %74, %79 : vector<16x16xf32>
    %81 = arith.mulf %80, %80 : vector<16x16xf32>
    %cst_34 = arith.constant dense<0.000000e+00> : vector<16xf32>
    %82 = vector.multi_reduction <add>, %81, %cst_34 [1] : vector<16x16xf32> to vector<16xf32>
    %83 = vector.shape_cast %82 : vector<16xf32> to vector<16x1xf32>
    %cst_35 = arith.constant 6.250000e-02 : f32
    %84 = vector.broadcast %cst_35 : f32 to vector<16x1xf32>
    %85 = arith.mulf %83, %84 : vector<16x1xf32>
    %cst_36 = arith.constant 9.99999974E-6 : f32
    %86 = vector.broadcast %cst_36 : f32 to vector<16x1xf32>
    %87 = arith.addf %85, %86 : vector<16x1xf32>
    %88 = math.rsqrt %87 : vector<16x1xf32>
    %89 = vector.broadcast %88 : vector<16x1xf32> to vector<16x16xf32>
    %90 = arith.mulf %80, %89 : vector<16x16xf32>
    %c0_37 = arith.constant 0 : index
    %c0_38 = arith.constant 0 : index
    %91 = vector.load %arg9[%c0_37, %c0_38] : memref<16x1xf32, #tpu.memory_space<vmem>>, vector<16x1xf32>
    %92 = vector.broadcast %91 : vector<16x1xf32> to vector<16x16xf32>
    %93 = arith.mulf %90, %92 : vector<16x16xf32>
    %c0_39 = arith.constant 0 : index
    %c0_40 = arith.constant 0 : index
    %94 = vector.load %arg10[%c0_39, %c0_40] : memref<16x1xf32, #tpu.memory_space<vmem>>, vector<16x1xf32>
    %95 = vector.broadcast %94 : vector<16x1xf32> to vector<16x16xf32>
    %96 = arith.addf %93, %95 : vector<16x16xf32>
    %c0_41 = arith.constant 0 : index
    %c0_42 = arith.constant 0 : index
    %97 = vector.load %arg11[%c0_41, %c0_42] : memref<16x16xf32, #tpu.memory_space<vmem>>, vector<16x16xf32>
    tpu.vector_store %arg11[%c0_41, %c0_42], %96 {strides = array<i32>} : memref<16x16xf32, #tpu.memory_space<vmem>>, vector<16x16xf32>,
    return
  }
  func.func @transform_0(%arg0: i32) -> (i32, i32) {
    %c0_i32 = arith.constant 0 : i32
    %c0_i32_0 = arith.constant 0 : i32
    %c0_i32_1 = arith.constant 0 : i32
    return %c0_i32, %c0_i32_0 : i32, i32
  }
  func.func @transform_1(%arg0: i32) -> (i32, i32) {
    %c0_i32 = arith.constant 0 : i32
    %c0_i32_0 = arith.constant 0 : i32
    %c0_i32_1 = arith.constant 0 : i32
    return %c0_i32, %c0_i32_0 : i32, i32
  }
  func.func @transform_2(%arg0: i32) -> (i32, i32) {
    %c0_i32 = arith.constant 0 : i32
    %c0_i32_0 = arith.constant 0 : i32
    %c0_i32_1 = arith.constant 0 : i32
    return %c0_i32, %c0_i32_0 : i32, i32
  }
  func.func @transform_3(%arg0: i32) -> (i32, i32) {
    %c0_i32 = arith.constant 0 : i32
    %c0_i32_0 = arith.constant 0 : i32
    %c0_i32_1 = arith.constant 0 : i32
    return %c0_i32, %c0_i32_0 : i32, i32
  }
  func.func @transform_4(%arg0: i32) -> (i32, i32) {
    %c0_i32 = arith.constant 0 : i32
    %c0_i32_0 = arith.constant 0 : i32
    %c0_i32_1 = arith.constant 0 : i32
    return %c0_i32, %c0_i32_0 : i32, i32
  }
  func.func @transform_5(%arg0: i32) -> (i32, i32) {
    %c0_i32 = arith.constant 0 : i32
    %c0_i32_0 = arith.constant 0 : i32
    %c0_i32_1 = arith.constant 0 : i32
    return %c0_i32, %c0_i32_0 : i32, i32
  }
  func.func @transform_6(%arg0: i32) -> (i32, i32) {
    %c0_i32 = arith.constant 0 : i32
    %c0_i32_0 = arith.constant 0 : i32
    %c0_i32_1 = arith.constant 0 : i32
    return %c0_i32, %c0_i32_0 : i32, i32
  }
  func.func @transform_7(%arg0: i32) -> (i32, i32) {
    %c0_i32 = arith.constant 0 : i32
    %c0_i32_0 = arith.constant 0 : i32
    %c0_i32_1 = arith.constant 0 : i32
    return %c0_i32, %c0_i32_0 : i32, i32
  }
  func.func @transform_8(%arg0: i32) -> (i32, i32) {
    %c0_i32 = arith.constant 0 : i32
    %c0_i32_0 = arith.constant 0 : i32
    %c0_i32_1 = arith.constant 0 : i32
    return %c0_i32, %c0_i32_0 : i32, i32
  }
  func.func @transform_9(%arg0: i32) -> (i32, i32) {
    %c0_i32 = arith.constant 0 : i32
    %c0_i32_0 = arith.constant 0 : i32
    %c0_i32_1 = arith.constant 0 : i32
    return %c0_i32, %c0_i32_0 : i32, i32
  }
  func.func @transform_10(%arg0: i32) -> (i32, i32) {
    %c0_i32 = arith.constant 0 : i32
    %c0_i32_0 = arith.constant 0 : i32
    %c0_i32_1 = arith.constant 0 : i32
    return %c0_i32, %c0_i32_0 : i32, i32
  }
}

</mosaic_0001>

<llo_original>
// kernel: gcn_forward.1
$region0: #{gcn_forward.1}
  #allocation0 [shape = 'u32[]', space=smem, size = 0x4, offset = 0x4, fixed_abs, tag = 'smem constant byte address 0x4 - core index']
  #allocation1 [shape = 'u32[144,128]{1,0:T(1,128)}', space=vmem, size = 0x12000, scoped, tag = 'internal scratch']
  %s0 = inlined_call_operand.vmem [shape: bf16[16,16], index: 0, kind: input, shape index: {}]
  %s1 = inlined_call_operand.vmem [shape: f32[8,16], index: 1, kind: input, shape index: {}]
  %s2 = inlined_call_operand.vmem [shape: f32[32,8], index: 2, kind: input, shape index: {}]
  %s3 = inlined_call_operand.vmem [shape: f32[32,1], index: 3, kind: input, shape index: {}]
  %s4 = inlined_call_operand.vmem [shape: f32[32,1], index: 4, kind: input, shape index: {}]
  %s5 = inlined_call_operand.vmem [shape: f32[32,1], index: 5, kind: input, shape index: {}]
  %s6 = inlined_call_operand.vmem [shape: f32[16,32], index: 6, kind: input, shape index: {}]
  %s7 = inlined_call_operand.vmem [shape: f32[16,1], index: 7, kind: input, shape index: {}]
  %s8 = inlined_call_operand.vmem [shape: f32[16,1], index: 8, kind: input, shape index: {}]
  %s9 = inlined_call_operand.vmem [shape: f32[16,1], index: 9, kind: input, shape index: {}]
  %s10 = inlined_call_operand.vmem [shape: f32[16,16], index: 10, kind: output, shape index: {}]
  %s11 = sld [smem:[#allocation0]]
  $region50: #{gcn_forward.1} parent=0
    _
  %s13 = ssub.s32 1, %s11
  %s14 = scalar_select 0, %s13, %s11
  // Predicated region
  $region2: #{gcn_forward.1} parent=0 // pred_check
    _
  $region3: #{gcn_forward.1} parent=0 // pred_check_branch
    %16 = sbr.rel (0) target = $region5
  $region4: #{gcn_forward.1} parent=0 // pred_region
    _
  $region5: #{gcn_forward.1} parent=0 // pred_fallthru
    _
  // Predicated region
  $region6: #{gcn_forward.1} parent=0 // pred_check
    _
  $region7: #{gcn_forward.1} parent=0 // pred_check_branch
    %18 = sbr.rel (0) target = $region9
  $region8: #{gcn_forward.1} parent=0 // pred_region
    _
  $region9: #{gcn_forward.1} parent=0 // pred_fallthru
    _
  // Predicated region
  $region10: #{gcn_forward.1} parent=0 // pred_check
    _
  $region11: #{gcn_forward.1} parent=0 // pred_check_branch
    %20 = sbr.rel (0) target = $region13
  $region12: #{gcn_forward.1} parent=0 // pred_region
    _
  $region13: #{gcn_forward.1} parent=0 // pred_fallthru
    _
  // Predicated region
  $region14: #{gcn_forward.1} parent=0 // pred_check
    _
  $region15: #{gcn_forward.1} parent=0 // pred_check_branch
    %22 = sbr.rel (0) target = $region17
  $region16: #{gcn_forward.1} parent=0 // pred_region
    _
  $region17: #{gcn_forward.1} parent=0 // pred_fallthru
    _
  // Predicated region
  $region18: #{gcn_forward.1} parent=0 // pred_check
    _
  $region19: #{gcn_forward.1} parent=0 // pred_check_branch
    %24 = sbr.rel (0) target = $region21
  $region20: #{gcn_forward.1} parent=0 // pred_region
    _
  $region21: #{gcn_forward.1} parent=0 // pred_fallthru
    _
  // Predicated region
  $region22: #{gcn_forward.1} parent=0 // pred_check
    _
  $region23: #{gcn_forward.1} parent=0 // pred_check_branch
    %26 = sbr.rel (0) target = $region25
  $region24: #{gcn_forward.1} parent=0 // pred_region
    _
  $region25: #{gcn_forward.1} parent=0 // pred_fallthru
    _
  // Predicated region
  $region26: #{gcn_forward.1} parent=0 // pred_check
    _
  $region27: #{gcn_forward.1} parent=0 // pred_check_branch
    %28 = sbr.rel (0) target = $region29
  $region28: #{gcn_forward.1} parent=0 // pred_region
    _
  $region29: #{gcn_forward.1} parent=0 // pred_fallthru
    _
  // Predicated region
  $region30: #{gcn_forward.1} parent=0 // pred_check
    _
  $region31: #{gcn_forward.1} parent=0 // pred_check_branch
    %30 = sbr.rel (0) target = $region33
  $region32: #{gcn_forward.1} parent=0 // pred_region
    _
  $region33: #{gcn_forward.1} parent=0 // pred_fallthru
    _
  // Predicated region
  $region34: #{gcn_forward.1} parent=0 // pred_check
    _
  $region35: #{gcn_forward.1} parent=0 // pred_check_branch
    %32 = sbr.rel (0) target = $region37
  $region36: #{gcn_forward.1} parent=0 // pred_region
    _
  $region37: #{gcn_forward.1} parent=0 // pred_fallthru
    _
  // Predicated region
  $region38: #{gcn_forward.1} parent=0 // pred_check
    _
  $region39: #{gcn_forward.1} parent=0 // pred_check_branch
    %34 = sbr.rel (0) target = $region41
  $region40: #{gcn_forward.1} parent=0 // pred_region
    _
  $region41: #{gcn_forward.1} parent=0 // pred_fallthru
    _
  %v35 = vld [vmem:[%s0] sm:$0xf]
  %v36 = vld [vmem:[%s0 + $0x4] sm:$0xf]
  %v37 = vunpack.c.l.bf16 %v35
  %v38 = vunpack.c.l.bf16 %v36
  %v39 = vlaneseq
  %v40 = vshrl.u32 %v39, 7
  %v41 = vadd.s32 %v40, 8
  %v42 = vlaneseq
  %v43 = vand.u32 %v42, 127
  %vm44 = vcmp.eq.s32.totalorder %v40, %v43
  %vm45 = vcmp.eq.s32.totalorder %v41, %v43
  %v46 = vsel %vm44, %v37, 0.0
  %v47 = vsel %vm45, %v38, 0.0
  %vm48 = vcmask 130048
  %v49 = vsel %vm48, %v46, 0.0
  %v50 = vsel %vm48, %v47, 0.0
  %v51 = vadd.f32 %v49, %v50
  %v52 = vrot.slane %v51, 4
  %v53 = vadd.f32 %v51, %v52
  %v54 = vrot.slane %v53, 2
  %v55 = vadd.f32 %v53, %v54
  %v56 = vrot.slane %v55, 1
  %v57 = vadd.f32 %v55, %v56
  %vm58 = vcmp.eq.f32.partialorder %v57, 0.0
  %v59 = vsel %vm58, 1.0, 0.0
  %v60 = vsel %vm48, %v37, 0.0
  %v61 = vsel %vm48, %v38, 0.0
  %v62 = vadd.f32 %v60, %v61
  %v63 = vrot.slane %v62, 4
  %v64 = vadd.f32 %v62, %v63
  %v65 = vrot.slane %v64, 2
  %v66 = vadd.f32 %v64, %v65
  %v67 = vrot.slane %v66, 1
  %v68 = vadd.f32 %v66, %v67
  %v69 = vadd.f32 %v68, %v59
  %vm70 = vcmp.gt.f32.partialorder %v69, 0.0
  %v71 = vrsqrt.pop %v69
  %v72 = vsel %vm70, %v71, 0.0
  %v73 = vmul.f32 %v59, %v72
  %v74 = vmul.f32 %v73, %v72
  %v75 = vld [vmem:[%s1] sm:$0xff]
  %v76 = vld [vmem:[%s2] sm:$0xff]
  %v77 = vld [vmem:[%s2 + $0x8] sm:$0xff]
  %v78 = vld [vmem:[%s2 + $0x10] sm:$0xff]
  %v79 = vld [vmem:[%s2 + $0x18] sm:$0xff]
  %vm80 = vcmask 64512
  %v82 = vsel %vm80, %v76, 0
  %v85 = vsel %vm80, %v77, 0
  %v88 = vsel %vm80, %v78, 0
  %v91 = vsel %vm80, %v79, 0
  %93 = vmatprep.subr.mxu0 0.0
  %94 = vmatpush1.msra.mxu0 %v75
  %95 = vmatprep.subr.mxu0 0.0
  %96 = vmatpush1.msra.mxu0 0.0
  %97 = vmatprep.subr.mxu0 0.0
  %98 = vmatpush1.msra.mxu0 0.0
  %99 = vmatprep.subr.mxu0 0.0
  %100 = vmatpush1.msra.mxu0 0.0
  %101 = vmatprep.subr.mxu0 0.0
  %102 = vmatpush1.msra.mxu0 0.0
  %103 = vmatprep.subr.mxu0 0.0
  %104 = vmatpush1.msra.mxu0 0.0
  %105 = vmatprep.subr.mxu0 0.0
  %106 = vmatpush1.msra.mxu0 0.0
  %107 = vmatprep.subr.mxu0 0.0
  %108 = vmatpush1.msra.mxu0 0.0
  %109 = vmatprep.subr.mxu0 0.0
  %110 = vmatpush1.msra.mxu0 0.0
  %111 = vmatprep.subr.mxu0 0.0
  %112 = vmatpush1.msra.mxu0 0.0
  %113 = vmatprep.subr.mxu0 0.0
  %114 = vmatpush1.msra.mxu0 0.0
  %115 = vmatprep.subr.mxu0 0.0
  %116 = vmatpush1.msra.mxu0 0.0
  %117 = vmatprep.subr.mxu0 0.0
  %118 = vmatpush1.msra.mxu0 0.0
  %119 = vmatprep.subr.mxu0 0.0
  %120 = vmatpush1.msra.mxu0 0.0
  %121 = vmatprep.subr.mxu0 0.0
  %122 = vmatpush1.msra.mxu0 0.0
  %123 = vmatprep.subr.mxu0 0.0
  %124 = vmatpush1.msra.mxu0 0.0
  %125 = vmatprep.subr.mxu0 0.0
  %126 = vmatpush1.msra.mxu0 0.0
  %127 = vmatprep.subr.mxu0 0.0
  %128 = vmatpush1.msra.mxu0 0.0
  %129 = vmatprep.subr.mxu0 0.0
  %130 = vmatpush1.msra.mxu0 0.0
  %131 = vmatprep.subr.mxu0 0.0
  %132 = vmatpush1.msra.mxu0 0.0
  %133 = vmatprep.subr.mxu0 0.0
  %134 = vmatpush1.msra.mxu0 0.0
  %135 = vmatprep.subr.mxu0 0.0
  %136 = vmatpush1.msra.mxu0 0.0
  %137 = vmatprep.subr.mxu0 0.0
  %138 = vmatpush1.msra.mxu0 0.0
  %139 = vmatprep.subr.mxu0 0.0
  %140 = vmatpush1.msra.mxu0 0.0
  %141 = vmatprep.subr.mxu0 0.0
  %142 = vmatpush1.msra.mxu0 0.0
  %143 = vmatprep.subr.mxu0 0.0
  %144 = vmatpush1.msra.mxu0 0.0
  %145 = vmatprep.subr.mxu0 0.0
  %146 = vmatpush1.msra.mxu0 0.0
  %147 = vmatprep.subr.mxu0 0.0
  %148 = vmatpush1.msra.mxu0 0.0
  %149 = vmatprep.subr.mxu0 0.0
  %150 = vmatpush1.msra.mxu0 0.0
  %151 = vmatprep.subr.mxu0 0.0
  %152 = vmatpush1.msra.mxu0 0.0
  %153 = vmatprep.subr.mxu0 0.0
  %154 = vmatpush1.msra.mxu0 0.0
  %155 = vmatprep.subr.mxu0 0.0
  %156 = vmatpush1.msra.mxu0 0.0
  %157 = vmatprep.mubr.f32.mxu0 0.0
  %158 = vmatmul.mubr.f32.gmra.mrb[0].mxu0 %v82
  %v159 = vpop.f32.mrb[0].mxu0
  %v160 = vadd.f32 0.0, %v159
  %v161 = vpop.f32.mrb[0].mxu0
  %162 = vmatprep.mubr.f32.mxu0 0.0
  %163 = vmatmul.mubr.f32.gmra.mrb[0].mxu0 %v85
  %v164 = vpop.f32.mrb[0].mxu0
  %v165 = vadd.f32 0.0, %v164
  %v166 = vpop.f32.mrb[0].mxu0
  %167 = vmatprep.mubr.f32.mxu0 0.0
  %168 = vmatmul.mubr.f32.gmra.mrb[0].mxu0 %v88
  %v169 = vpop.f32.mrb[0].mxu0
  %v170 = vadd.f32 0.0, %v169
  %v171 = vpop.f32.mrb[0].mxu0
  %172 = vmatprep.mubr.f32.mxu0 0.0
  %173 = vmatmul.mubr.f32.gmra.mrb[0].mxu0 %v91
  %v174 = vpop.f32.mrb[0].mxu0
  %v175 = vadd.f32 0.0, %v174
  %v176 = vpop.f32.mrb[0].mxu0
  %177 = vdwg.mxu0
  %v178 = vmul.f32 %v160, %v72
  %v179 = vmul.f32 %v165, %v72
  %v180 = vmul.f32 %v170, %v72
  %v181 = vmul.f32 %v175, %v72
  %v183 = vsel %vm48, %v178, 0
  %v186 = vsel %vm48, %v179, 0
  %v189 = vsel %vm48, %v180, 0
  %v192 = vsel %vm48, %v181, 0
  %194 = vmatprep.subr.mxu0 0.0
  %195 = vmatpush1.msra.mxu0 %v37
  %196 = vmatprep.subr.mxu0 0.0
  %197 = vmatpush1.msra.mxu0 %v38
  %198 = vmatprep.subr.mxu0 0.0
  %199 = vmatpush1.msra.mxu0 0.0
  %200 = vmatprep.subr.mxu0 0.0
  %201 = vmatpush1.msra.mxu0 0.0
  %202 = vmatprep.subr.mxu0 0.0
  %203 = vmatpush1.msra.mxu0 0.0
  %204 = vmatprep.subr.mxu0 0.0
  %205 = vmatpush1.msra.mxu0 0.0
  %206 = vmatprep.subr.mxu0 0.0
  %207 = vmatpush1.msra.mxu0 0.0
  %208 = vmatprep.subr.mxu0 0.0
  %209 = vmatpush1.msra.mxu0 0.0
  %210 = vmatprep.subr.mxu0 0.0
  %211 = vmatpush1.msra.mxu0 0.0
  %212 = vmatprep.subr.mxu0 0.0
  %213 = vmatpush1.msra.mxu0 0.0
  %214 = vmatprep.subr.mxu0 0.0
  %215 = vmatpush1.msra.mxu0 0.0
  %216 = vmatprep.subr.mxu0 0.0
  %217 = vmatpush1.msra.mxu0 0.0
  %218 = vmatprep.subr.mxu0 0.0
  %219 = vmatpush1.msra.mxu0 0.0
  %220 = vmatprep.subr.mxu0 0.0
  %221 = vmatpush1.msra.mxu0 0.0
  %222 = vmatprep.subr.mxu0 0.0
  %223 = vmatpush1.msra.mxu0 0.0
  %224 = vmatprep.subr.mxu0 0.0
  %225 = vmatpush1.msra.mxu0 0.0
  %226 = vmatprep.subr.mxu0 0.0
  %227 = vmatpush1.msra.mxu0 0.0
  %228 = vmatprep.subr.mxu0 0.0
  %229 = vmatpush1.msra.mxu0 0.0
  %230 = vmatprep.subr.mxu0 0.0
  %231 = vmatpush1.msra.mxu0 0.0
  %232 = vmatprep.subr.mxu0 0.0
  %233 = vmatpush1.msra.mxu0 0.0
  %234 = vmatprep.subr.mxu0 0.0
  %235 = vmatpush1.msra.mxu0 0.0
  %236 = vmatprep.subr.mxu0 0.0
  %237 = vmatpush1.msra.mxu0 0.0
  %238 = vmatprep.subr.mxu0 0.0
  %239 = vmatpush1.msra.mxu0 0.0
  %240 = vmatprep.subr.mxu0 0.0
  %241 = vmatpush1.msra.mxu0 0.0
  %242 = vmatprep.subr.mxu0 0.0
  %243 = vmatpush1.msra.mxu0 0.0
  %244 = vmatprep.subr.mxu0 0.0
  %245 = vmatpush1.msra.mxu0 0.0
  %246 = vmatprep.subr.mxu0 0.0
  %247 = vmatpush1.msra.mxu0 0.0
  %248 = vmatprep.subr.mxu0 0.0
  %249 = vmatpush1.msra.mxu0 0.0
  %250 = vmatprep.subr.mxu0 0.0
  %251 = vmatpush1.msra.mxu0 0.0
  %252 = vmatprep.subr.mxu0 0.0
  %253 = vmatpush1.msra.mxu0 0.0
  %254 = vmatprep.subr.mxu0 0.0
  %255 = vmatpush1.msra.mxu0 0.0
  %256 = vmatprep.subr.mxu0 0.0
  %257 = vmatpush1.msra.mxu0 0.0
  %258 = vmatprep.mubr.f32.mxu0 0.0
  %259 = vmatmul.mubr.f32.gmra.mrb[0].mxu0 %v183
  %v260 = vpop.f32.mrb[0].mxu0
  %v261 = vadd.f32 0.0, %v260
  %v262 = vpop.f32.mrb[0].mxu0
  %263 = vmatprep.mubr.f32.mxu0 0.0
  %264 = vmatmul.mubr.f32.gmra.mrb[0].mxu0 %v186
  %v265 = vpop.f32.mrb[0].mxu0
  %v266 = vadd.f32 0.0, %v265
  %v267 = vpop.f32.mrb[0].mxu0
  %268 = vmatprep.mubr.f32.mxu0 0.0
  %269 = vmatmul.mubr.f32.gmra.mrb[0].mxu0 %v189
  %v270 = vpop.f32.mrb[0].mxu0
  %v271 = vadd.f32 0.0, %v270
  %v272 = vpop.f32.mrb[0].mxu0
  %273 = vmatprep.mubr.f32.mxu0 0.0
  %274 = vmatmul.mubr.f32.gmra.mrb[0].mxu0 %v192
  %v275 = vpop.f32.mrb[0].mxu0
  %v276 = vadd.f32 0.0, %v275
  %v277 = vpop.f32.mrb[0].mxu0
  %278 = vdwg.mxu0
  %v279 = vmul.f32 %v72, %v261
  %v280 = vmul.f32 %v72, %v266
  %v281 = vmul.f32 %v72, %v271
  %v282 = vmul.f32 %v72, %v276
  %v283 = vmul.f32 %v74, %v160
  %v284 = vmul.f32 %v74, %v165
  %v285 = vmul.f32 %v74, %v170
  %v286 = vmul.f32 %v74, %v175
  %v287 = vadd.f32 %v279, %v283
  %v288 = vadd.f32 %v280, %v284
  %v289 = vadd.f32 %v281, %v285
  %v290 = vadd.f32 %v282, %v286
  %v291 = vld [vmem:[%s3] sm:$0xff]
  %v292 = vld [vmem:[%s3 + $0x8] sm:$0xff]
  %v293 = vld [vmem:[%s3 + $0x10] sm:$0xff]
  %v294 = vld [vmem:[%s3 + $0x18] sm:$0xff]
  %296 = vset.pattern.permute.xlu0 0
  %297 = vperm.xlu0 %296, %v291
  %v298 = vpop.permute.xlu0 %297
  %301 = vset.pattern.permute.xlu0 0
  %302 = vperm.xlu0 %301, %v292
  %v303 = vpop.permute.xlu0 %302
  %306 = vset.pattern.permute.xlu0 0
  %307 = vperm.xlu0 %306, %v293
  %v308 = vpop.permute.xlu0 %307
  %311 = vset.pattern.permute.xlu0 0
  %312 = vperm.xlu0 %311, %v294
  %v313 = vpop.permute.xlu0 %312
  %v315 = vadd.f32 %v287, %v298
  %v316 = vadd.f32 %v288, %v303
  %v317 = vadd.f32 %v289, %v308
  %v318 = vadd.f32 %v290, %v313
  %v319 = vsel %vm48, %v315, 0.0
  %320 = vadd.xlane.f32.xlu0 %v319
  %v321 = vpop.xlane.xlu0 %320
  %v322 = vsel %vm48, %v316, 0.0
  %323 = vadd.xlane.f32.xlu0 %v322
  %v324 = vpop.xlane.xlu0 %323
  %v325 = vsel %vm48, %v317, 0.0
  %326 = vadd.xlane.f32.xlu0 %v325
  %v327 = vpop.xlane.xlu0 %326
  %v328 = vsel %vm48, %v318, 0.0
  %329 = vadd.xlane.f32.xlu0 %v328
  %v330 = vpop.xlane.xlu0 %329
  %v331 = vmul.f32 %v321, 0.0625
  %v332 = vmul.f32 %v324, 0.0625
  %v333 = vmul.f32 %v327, 0.0625
  %v334 = vmul.f32 %v330, 0.0625
  %v335 = vsub.f32 %v315, %v331
  %v336 = vsub.f32 %v316, %v332
  %v337 = vsub.f32 %v317, %v333
  %v338 = vsub.f32 %v318, %v334
  %v339 = vmul.f32 %v335, %v335
  %v340 = vmul.f32 %v336, %v336
  %v341 = vmul.f32 %v337, %v337
  %v342 = vmul.f32 %v338, %v338
  %v343 = vsel %vm48, %v339, 0.0
  %344 = vadd.xlane.f32.xlu0 %v343
  %v345 = vpop.xlane.xlu0 %344
  %v346 = vsel %vm48, %v340, 0.0
  %347 = vadd.xlane.f32.xlu0 %v346
  %v348 = vpop.xlane.xlu0 %347
  %v349 = vsel %vm48, %v341, 0.0
  %350 = vadd.xlane.f32.xlu0 %v349
  %v351 = vpop.xlane.xlu0 %350
  %v352 = vsel %vm48, %v342, 0.0
  %353 = vadd.xlane.f32.xlu0 %v352
  %v354 = vpop.xlane.xlu0 %353
  %v355 = vmul.f32 %v345, 0.0625
  %v356 = vmul.f32 %v348, 0.0625
  %v357 = vmul.f32 %v351, 0.0625
  %v358 = vmul.f32 %v354, 0.0625
  %v359 = vadd.f32 %v355, 1e-05
  %v360 = vadd.f32 %v356, 1e-05
  %v361 = vadd.f32 %v357, 1e-05
  %v362 = vadd.f32 %v358, 1e-05
  %v363 = vrsqrt.pop %v359
  %v364 = vrsqrt.pop %v360
  %v365 = vrsqrt.pop %v361
  %v366 = vrsqrt.pop %v362
  %v367 = vmul.f32 %v335, %v363
  %v368 = vmul.f32 %v336, %v364
  %v369 = vmul.f32 %v337, %v365
  %v370 = vmul.f32 %v338, %v366
  %v371 = vld [vmem:[%s4] sm:$0xff]
  %v372 = vld [vmem:[%s4 + $0x8] sm:$0xff]
  %v373 = vld [vmem:[%s4 + $0x10] sm:$0xff]
  %v374 = vld [vmem:[%s4 + $0x18] sm:$0xff]
  %376 = vset.pattern.permute.xlu0 0
  %377 = vperm.xlu0 %376, %v371
  %v378 = vpop.permute.xlu0 %377
  %381 = vset.pattern.permute.xlu0 0
  %382 = vperm.xlu0 %381, %v372
  %v383 = vpop.permute.xlu0 %382
  %386 = vset.pattern.permute.xlu0 0
  %387 = vperm.xlu0 %386, %v373
  %v388 = vpop.permute.xlu0 %387
  %391 = vset.pattern.permute.xlu0 0
  %392 = vperm.xlu0 %391, %v374
  %v393 = vpop.permute.xlu0 %392
  %v395 = vmul.f32 %v367, %v378
  %v396 = vmul.f32 %v368, %v383
  %v397 = vmul.f32 %v369, %v388
  %v398 = vmul.f32 %v370, %v393
  %v399 = vld [vmem:[%s5] sm:$0xff]
  %v400 = vld [vmem:[%s5 + $0x8] sm:$0xff]
  %v401 = vld [vmem:[%s5 + $0x10] sm:$0xff]
  %v402 = vld [vmem:[%s5 + $0x18] sm:$0xff]
  %404 = vset.pattern.permute.xlu0 0
  %405 = vperm.xlu0 %404, %v399
  %v406 = vpop.permute.xlu0 %405
  %409 = vset.pattern.permute.xlu0 0
  %410 = vperm.xlu0 %409, %v400
  %v411 = vpop.permute.xlu0 %410
  %414 = vset.pattern.permute.xlu0 0
  %415 = vperm.xlu0 %414, %v401
  %v416 = vpop.permute.xlu0 %415
  %419 = vset.pattern.permute.xlu0 0
  %420 = vperm.xlu0 %419, %v402
  %v421 = vpop.permute.xlu0 %420
  %v423 = vadd.f32 %v395, %v406
  %v424 = vadd.f32 %v396, %v411
  %v425 = vadd.f32 %v397, %v416
  %v426 = vadd.f32 %v398, %v421
  %v427 = vmax.f32 %v423, 0.0
  %v428 = vmax.f32 %v424, 0.0
  %v429 = vmax.f32 %v425, 0.0
  %v430 = vmax.f32 %v426, 0.0
  %v431 = vld [vmem:[%s6] sm:$0xff]
  %v432 = vld [vmem:[%s6 + $0x8] sm:$0xff]
  %vm433 = vcmask 261120
  %v435 = vsel %vm433, %v431, 0
  %v438 = vsel %vm433, %v432, 0
  %440 = vmatprep.subr.mxu0 0.0
  %441 = vmatpush1.msra.mxu0 %v427
  %442 = vmatprep.subr.mxu0 0.0
  %443 = vmatpush1.msra.mxu0 %v428
  %444 = vmatprep.subr.mxu0 0.0
  %445 = vmatpush1.msra.mxu0 %v429
  %446 = vmatprep.subr.mxu0 0.0
  %447 = vmatpush1.msra.mxu0 %v430
  %448 = vmatprep.subr.mxu0 0.0
  %449 = vmatpush1.msra.mxu0 0.0
  %450 = vmatprep.subr.mxu0 0.0
  %451 = vmatpush1.msra.mxu0 0.0
  %452 = vmatprep.subr.mxu0 0.0
  %453 = vmatpush1.msra.mxu0 0.0
  %454 = vmatprep.subr.mxu0 0.0
  %455 = vmatpush1.msra.mxu0 0.0
  %456 = vmatprep.subr.mxu0 0.0
  %457 = vmatpush1.msra.mxu0 0.0
  %458 = vmatprep.subr.mxu0 0.0
  %459 = vmatpush1.msra.mxu0 0.0
  %460 = vmatprep.subr.mxu0 0.0
  %461 = vmatpush1.msra.mxu0 0.0
  %462 = vmatprep.subr.mxu0 0.0
  %463 = vmatpush1.msra.mxu0 0.0
  %464 = vmatprep.subr.mxu0 0.0
  %465 = vmatpush1.msra.mxu0 0.0
  %466 = vmatprep.subr.mxu0 0.0
  %467 = vmatpush1.msra.mxu0 0.0
  %468 = vmatprep.subr.mxu0 0.0
  %469 = vmatpush1.msra.mxu0 0.0
  %470 = vmatprep.subr.mxu0 0.0
  %471 = vmatpush1.msra.mxu0 0.0
  %472 = vmatprep.subr.mxu0 0.0
  %473 = vmatpush1.msra.mxu0 0.0
  %474 = vmatprep.subr.mxu0 0.0
  %475 = vmatpush1.msra.mxu0 0.0
  %476 = vmatprep.subr.mxu0 0.0
  %477 = vmatpush1.msra.mxu0 0.0
  %478 = vmatprep.subr.mxu0 0.0
  %479 = vmatpush1.msra.mxu0 0.0
  %480 = vmatprep.subr.mxu0 0.0
  %481 = vmatpush1.msra.mxu0 0.0
  %482 = vmatprep.subr.mxu0 0.0
  %483 = vmatpush1.msra.mxu0 0.0
  %484 = vmatprep.subr.mxu0 0.0
  %485 = vmatpush1.msra.mxu0 0.0
  %486 = vmatprep.subr.mxu0 0.0
  %487 = vmatpush1.msra.mxu0 0.0
  %488 = vmatprep.subr.mxu0 0.0
  %489 = vmatpush1.msra.mxu0 0.0
  %490 = vmatprep.subr.mxu0 0.0
  %491 = vmatpush1.msra.mxu0 0.0
  %492 = vmatprep.subr.mxu0 0.0
  %493 = vmatpush1.msra.mxu0 0.0
  %494 = vmatprep.subr.mxu0 0.0
  %495 = vmatpush1.msra.mxu0 0.0
  %496 = vmatprep.subr.mxu0 0.0
  %497 = vmatpush1.msra.mxu0 0.0
  %498 = vmatprep.subr.mxu0 0.0
  %499 = vmatpush1.msra.mxu0 0.0
  %500 = vmatprep.subr.mxu0 0.0
  %501 = vmatpush1.msra.mxu0 0.0
  %502 = vmatprep.subr.mxu0 0.0
  %503 = vmatpush1.msra.mxu0 0.0
  %504 = vmatprep.mubr.f32.mxu0 0.0
  %505 = vmatmul.mubr.f32.gmra.mrb[0].mxu0 %v435
  %v506 = vpop.f32.mrb[0].mxu0
  %v507 = vadd.f32 0.0, %v506
  %v508 = vpop.f32.mrb[0].mxu0
  %509 = vmatprep.mubr.f32.mxu0 0.0
  %510 = vmatmul.mubr.f32.gmra.mrb[0].mxu0 %v438
  %v511 = vpop.f32.mrb[0].mxu0
  %v512 = vadd.f32 0.0, %v511
  %v513 = vpop.f32.mrb[0].mxu0
  %514 = vdwg.mxu0
  %v515 = vmul.f32 %v507, %v72
  %v516 = vmul.f32 %v512, %v72
  %v518 = vsel %vm48, %v515, 0
  %v521 = vsel %vm48, %v516, 0
  %523 = vmatprep.subr.mxu0 0.0
  %524 = vmatpush1.msra.mxu0 %v37
  %525 = vmatprep.subr.mxu0 0.0
  %526 = vmatpush1.msra.mxu0 %v38
  %527 = vmatprep.subr.mxu0 0.0
  %528 = vmatpush1.msra.mxu0 0.0
  %529 = vmatprep.subr.mxu0 0.0
  %530 = vmatpush1.msra.mxu0 0.0
  %531 = vmatprep.subr.mxu0 0.0
  %532 = vmatpush1.msra.mxu0 0.0
  %533 = vmatprep.subr.mxu0 0.0
  %534 = vmatpush1.msra.mxu0 0.0
  %535 = vmatprep.subr.mxu0 0.0
  %536 = vmatpush1.msra.mxu0 0.0
  %537 = vmatprep.subr.mxu0 0.0
  %538 = vmatpush1.msra.mxu0 0.0
  %539 = vmatprep.subr.mxu0 0.0
  %540 = vmatpush1.msra.mxu0 0.0
  %541 = vmatprep.subr.mxu0 0.0
  %542 = vmatpush1.msra.mxu0 0.0
  %543 = vmatprep.subr.mxu0 0.0
  %544 = vmatpush1.msra.mxu0 0.0
  %545 = vmatprep.subr.mxu0 0.0
  %546 = vmatpush1.msra.mxu0 0.0
  %547 = vmatprep.subr.mxu0 0.0
  %548 = vmatpush1.msra.mxu0 0.0
  %549 = vmatprep.subr.mxu0 0.0
  %550 = vmatpush1.msra.mxu0 0.0
  %551 = vmatprep.subr.mxu0 0.0
  %552 = vmatpush1.msra.mxu0 0.0
  %553 = vmatprep.subr.mxu0 0.0
  %554 = vmatpush1.msra.mxu0 0.0
  %555 = vmatprep.subr.mxu0 0.0
  %556 = vmatpush1.msra.mxu0 0.0
  %557 = vmatprep.subr.mxu0 0.0
  %558 = vmatpush1.msra.mxu0 0.0
  %559 = vmatprep.subr.mxu0 0.0
  %560 = vmatpush1.msra.mxu0 0.0
  %561 = vmatprep.subr.mxu0 0.0
  %562 = vmatpush1.msra.mxu0 0.0
  %563 = vmatprep.subr.mxu0 0.0
  %564 = vmatpush1.msra.mxu0 0.0
  %565 = vmatprep.subr.mxu0 0.0
  %566 = vmatpush1.msra.mxu0 0.0
  %567 = vmatprep.subr.mxu0 0.0
  %568 = vmatpush1.msra.mxu0 0.0
  %569 = vmatprep.subr.mxu0 0.0
  %570 = vmatpush1.msra.mxu0 0.0
  %571 = vmatprep.subr.mxu0 0.0
  %572 = vmatpush1.msra.mxu0 0.0
  %573 = vmatprep.subr.mxu0 0.0
  %574 = vmatpush1.msra.mxu0 0.0
  %575 = vmatprep.subr.mxu0 0.0
  %576 = vmatpush1.msra.mxu0 0.0
  %577 = vmatprep.subr.mxu0 0.0
  %578 = vmatpush1.msra.mxu0 0.0
  %579 = vmatprep.subr.mxu0 0.0
  %580 = vmatpush1.msra.mxu0 0.0
  %581 = vmatprep.subr.mxu0 0.0
  %582 = vmatpush1.msra.mxu0 0.0
  %583 = vmatprep.subr.mxu0 0.0
  %584 = vmatpush1.msra.mxu0 0.0
  %585 = vmatprep.subr.mxu0 0.0
  %586 = vmatpush1.msra.mxu0 0.0
  %587 = vmatprep.mubr.f32.mxu0 0.0
  %588 = vmatmul.mubr.f32.gmra.mrb[0].mxu0 %v518
  %v589 = vpop.f32.mrb[0].mxu0
  %v590 = vadd.f32 0.0, %v589
  %v591 = vpop.f32.mrb[0].mxu0
  %592 = vmatprep.mubr.f32.mxu0 0.0
  %593 = vmatmul.mubr.f32.gmra.mrb[0].mxu0 %v521
  %v594 = vpop.f32.mrb[0].mxu0
  %v595 = vadd.f32 0.0, %v594
  %v596 = vpop.f32.mrb[0].mxu0
  %597 = vdwg.mxu0
  %v598 = vmul.f32 %v72, %v590
  %v599 = vmul.f32 %v72, %v595
  %v600 = vmul.f32 %v74, %v507
  %v601 = vmul.f32 %v74, %v512
  %v602 = vadd.f32 %v598, %v600
  %v603 = vadd.f32 %v599, %v601
  %v604 = vld [vmem:[%s7] sm:$0xff]
  %v605 = vld [vmem:[%s7 + $0x8] sm:$0xff]
  %607 = vset.pattern.permute.xlu0 0
  %608 = vperm.xlu0 %607, %v604
  %v609 = vpop.permute.xlu0 %608
  %612 = vset.pattern.permute.xlu0 0
  %613 = vperm.xlu0 %612, %v605
  %v614 = vpop.permute.xlu0 %613
  %v616 = vadd.f32 %v602, %v609
  %v617 = vadd.f32 %v603, %v614
  %v618 = vsel %vm48, %v616, 0.0
  %619 = vadd.xlane.f32.xlu0 %v618
  %v620 = vpop.xlane.xlu0 %619
  %v621 = vsel %vm48, %v617, 0.0
  %622 = vadd.xlane.f32.xlu0 %v621
  %v623 = vpop.xlane.xlu0 %622
  %v624 = vmul.f32 %v620, 0.0625
  %v625 = vmul.f32 %v623, 0.0625
  %v626 = vsub.f32 %v616, %v624
  %v627 = vsub.f32 %v617, %v625
  %v628 = vmul.f32 %v626, %v626
  %v629 = vmul.f32 %v627, %v627
  %v630 = vsel %vm48, %v628, 0.0
  %631 = vadd.xlane.f32.xlu0 %v630
  %v632 = vpop.xlane.xlu0 %631
  %v633 = vsel %vm48, %v629, 0.0
  %634 = vadd.xlane.f32.xlu0 %v633
  %v635 = vpop.xlane.xlu0 %634
  %v636 = vmul.f32 %v632, 0.0625
  %v637 = vmul.f32 %v635, 0.0625
  %v638 = vadd.f32 %v636, 1e-05
  %v639 = vadd.f32 %v637, 1e-05
  %v640 = vrsqrt.pop %v638
  %v641 = vrsqrt.pop %v639
  %v642 = vmul.f32 %v626, %v640
  %v643 = vmul.f32 %v627, %v641
  %v644 = vld [vmem:[%s8] sm:$0xff]
  %v645 = vld [vmem:[%s8 + $0x8] sm:$0xff]
  %647 = vset.pattern.permute.xlu0 0
  %648 = vperm.xlu0 %647, %v644
  %v649 = vpop.permute.xlu0 %648
  %652 = vset.pattern.permute.xlu0 0
  %653 = vperm.xlu0 %652, %v645
  %v654 = vpop.permute.xlu0 %653
  %v656 = vmul.f32 %v642, %v649
  %v657 = vmul.f32 %v643, %v654
  %v658 = vld [vmem:[%s9] sm:$0xff]
  %v659 = vld [vmem:[%s9 + $0x8] sm:$0xff]
  %661 = vset.pattern.permute.xlu0 0
  %662 = vperm.xlu0 %661, %v658
  %v663 = vpop.permute.xlu0 %662
  %666 = vset.pattern.permute.xlu0 0
  %667 = vperm.xlu0 %666, %v659
  %v668 = vpop.permute.xlu0 %667
  %v670 = vadd.f32 %v656, %v663
  %v671 = vadd.f32 %v657, %v668
  %672 = vst.msk [vmem:[%s10] sm:$0xff] %vm48, %v670
  %673 = vst.msk [vmem:[%s10 + $0x8] sm:$0xff] %vm48, %v671
  // Predicated region
  $region42: #{gcn_forward.1} parent=0 // pred_check
    _
  $region43: #{gcn_forward.1} parent=0 // pred_check_branch
    %675 = sbr.rel (0) target = $region45
  $region44: #{gcn_forward.1} parent=0 // pred_region
    _
  $region45: #{gcn_forward.1} parent=0 // pred_fallthru
    _
  // Predicated region
  $region46: #{gcn_forward.1} parent=0 // pred_check
    _
  $region47: #{gcn_forward.1} parent=0 // pred_check_branch
    %677 = sbr.rel (0) target = $region49
  $region48: #{gcn_forward.1} parent=0 // pred_region
    _
  $region49: #{gcn_forward.1} parent=0 // pred_fallthru
    _

</llo_original>
